<compile_context>
chip_gen: v7x
topology: tpu7x:2x2x1
jax: 0.10.0
libtpu: 0.0.40
codegen_flags: <defaults>
</compile_context>

<pallas_src>
import functools

import jax
import jax.numpy as jnp
from jax import lax
from jax.experimental import pallas as pl
from jax.experimental.pallas import tpu as pltpu

LANES = 128
CHUNK_ROWS = 256                      # rows folded into the accumulators per inner step
TARGET_TILE_BYTES = 2 * 1024 * 1024   # ~2 MiB of input streamed per grid step (any dtype)


def _num_parallel_cores():
    """2 when a single JAX device spans two TensorCores (v4/v5p megacore, v7x)."""
    try:
        kind = jax.devices()[0].device_kind.lower()
    except Exception:
        return 1
    if any(tag in kind for tag in ("v4", "v5p", "v7")):
        return 2
    return 1


def _var_stats_kernel(shift_ref, x_ref, sum_ref, sq_ref, acc_s, acc_q, *,
                      inner, block_rows, chunk_rows, valid_rows,
                      full_blocks, total_blocks):
    """Accumulate per-core scalar sum / sum-of-squares of (yHat - shift).

    Grid = (num_par, inner). Axis 0 is "parallel" (2-TC split on multi-core
    chips), axis 1 is the sequential streaming reduction.
    """
    p = pl.program_id(0)
    i = pl.program_id(1)
    block_idx = p * inner + i
    n_chunks = block_rows // chunk_rows
    shift = shift_ref[0]

    @pl.when(i == 0)
    def _():
        acc_s[...] = jnp.zeros_like(acc_s)
        acc_q[...] = jnp.zeros_like(acc_q)

    def accumulate(masked):
        # Number of rows of this block that hold real data (may be <= 0 for a
        # phantom block created by rounding the grid up to num_par).
        rows_left = valid_rows - block_idx * block_rows

        def chunk_step(c, carry):
            start = pl.multiple_of(c * chunk_rows, chunk_rows)
            xc = x_ref[pl.ds(start, chunk_rows), :].astype(jnp.float32) - shift
            if masked:
                row_ids = start + lax.broadcasted_iota(
                    jnp.int32, (chunk_rows, LANES), 0)
                xc = jnp.where(row_ids < rows_left, xc, 0.0)
            xr = xc.reshape(chunk_rows // 8, 8, LANES)
            # Pure VPU elementwise adds; no cross-lane work in the hot loop.
            acc_s[...] += jnp.sum(xr, axis=0)
            acc_q[...] += jnp.sum(xr * xr, axis=0)
            return carry

        lax.fori_loop(0, n_chunks, chunk_step, 0)

    if full_blocks >= total_blocks:       # static: every block is fully valid
        accumulate(False)
    elif full_blocks == 0:                # static: single (ragged) block
        accumulate(True)
    else:
        @pl.when(block_idx < full_blocks)
        def _():
            accumulate(False)

        @pl.when(block_idx >= full_blocks)
        def _():
            accumulate(True)

    @pl.when(i == inner - 1)
    def _():
        # Cross-lane/sublane reduce (XLU) once per core; epilogue only combines
        # num_par scalars.
        sum_ref[...] = jnp.sum(acc_s[...]).reshape(1, 1, 1)
        sq_ref[...] = jnp.sum(acc_q[...]).reshape(1, 1, 1)


def var_loss(yhat, y=None):
    """Pallas implementation of VarLoss.forward: returns torch.var(yHat) (unbiased)."""
    del y  # VarLoss ignores the target tensor.

    n_total = int(yhat.size)
    if n_total == 0:
        return jnp.float32(jnp.nan)   # matches torch.var of an empty tensor

    elem_bytes = jnp.dtype(yhat.dtype).itemsize
    flat = jnp.ravel(yhat)            # contiguous reshape: no copy

    # Cheap mean pre-estimate (first <=128 elements) used as an in-kernel shift.
    head = min(n_total, LANES)
    shift = jnp.mean(flat[:head].astype(jnp.float32))

    # Lane padding only when n is not a multiple of 128 (< 128 zeros appended;
    # their contribution under the shift is removed exactly in the epilogue).
    # The 128-aligned case (most tensors) needs no copy at all.
    pad = (LANES - n_total % LANES) % LANES
    if pad:
        flat = jnp.pad(flat, (0, pad))
    rows = (n_total + pad) // LANES
    x2d = flat.reshape(rows, LANES)

    # dtype-aware tile: ~TARGET_TILE_BYTES of input per grid step.
    rows_ceil8 = ((rows + 7) // 8) * 8
    target_rows = max(CHUNK_ROWS, TARGET_TILE_BYTES // (LANES * elem_bytes))
    target_rows = (target_rows // CHUNK_ROWS) * CHUNK_ROWS
    if rows_ceil8 <= CHUNK_ROWS:
        block_rows = rows_ceil8
        chunk_rows = block_rows
    else:
        block_rows = min(target_rows,
                         ((rows_ceil8 + CHUNK_ROWS - 1) // CHUNK_ROWS) * CHUNK_ROWS)
        chunk_rows = CHUNK_ROWS

    num_blocks = -(-rows // block_rows)
    full_blocks = rows // block_rows          # blocks with no ragged rows

    num_par = 2 if (_num_parallel_cores() >= 2 and num_blocks >= 2) else 1
    inner = -(-num_blocks // num_par)
    total_blocks = num_par * inner            # may exceed num_blocks by <= num_par-1

    kernel = functools.partial(
        _var_stats_kernel,
        inner=inner, block_rows=block_rows, chunk_rows=chunk_rows,
        valid_rows=rows, full_blocks=full_blocks, total_blocks=total_blocks)

    last_block = num_blocks - 1
    in_map = lambda p, i: (jnp.minimum(p * inner + i, last_block), 0)
    out_map = lambda p, i: (p, 0, 0)

    psum, psq = pl.pallas_call(
        kernel,
        out_shape=(
            jax.ShapeDtypeStruct((num_par, 1, 1), jnp.float32),
            jax.ShapeDtypeStruct((num_par, 1, 1), jnp.float32),
        ),
        grid_spec=pltpu.PrefetchScalarGridSpec(
            num_scalar_prefetch=0,
            grid=(num_par, inner),
            in_specs=[
                pl.BlockSpec(memory_space=pltpu.MemorySpace.SMEM),   # shift scalar
                pl.BlockSpec((block_rows, LANES), in_map),           # streamed yHat tiles
            ],
            out_specs=[
                pl.BlockSpec((1, 1, 1), out_map),
                pl.BlockSpec((1, 1, 1), out_map),
            ],
            scratch_shapes=[
                pltpu.VMEM((8, LANES), jnp.float32),
                pltpu.VMEM((8, LANES), jnp.float32),
            ],
        ),
        compiler_params=pltpu.CompilerParams(
            dimension_semantics=("parallel", "arbitrary"),
        ),
        cost_estimate=pl.CostEstimate(
            flops=4 * n_total,
            transcendentals=0,
            bytes_accessed=(n_total + pad) * elem_bytes + 8 * num_par + 4,
        ),
    )(shift.reshape((1,)), x2d)

    # Tiny scalar epilogue: combine num_par per-core partials and finish.
    n = jnp.float32(n_total)
    s = jnp.sum(psum)                 # sum of (x - shift) over real + padded elems
    q = jnp.sum(psq)                  # sum of (x - shift)^2
    if pad:                           # remove the exact contribution of the zero pad
        s = s + pad * shift
        q = q - pad * shift * shift
    var_sum = jnp.maximum(q - s * (s / n), 0.0)
    var = var_sum / (n - 1.0)         # unbiased (ddof=1), matches torch.var default
    out_dtype = yhat.dtype if jnp.issubdtype(yhat.dtype, jnp.floating) else jnp.float32
    return var.astype(out_dtype)


def _var_loss_ref(yhat, y=None):
    """Pure-JAX reference mirroring the PyTorch forward exactly."""
    return jnp.var(yhat.astype(jnp.float32), ddof=1)


if __name__ == "__main__":
    key = jax.random.PRNGKey(0)
    k1, k2 = jax.random.split(key)
    shape = (2, 4, 16, 16)  # 2048 elements, typical small regression-output tensor
    yhat = jax.random.normal(k1, shape, dtype=jnp.float32)
    y = 0.7 * yhat + 0.3 * jax.random.normal(k2, shape, dtype=jnp.float32)

    loss = var_loss(yhat, y)
    loss = jax.block_until_ready(loss)

    ref = _var_loss_ref(yhat, y)
    assert jnp.allclose(loss, ref, rtol=1e-5, atol=1e-6), (loss, ref)

    # Also exercise a ragged / non-128-multiple size to cover the masking path.
    yhat2 = jax.random.normal(k2, (3, 5, 7, 11), dtype=jnp.float32) + 3.0
    loss2 = jax.block_until_ready(var_loss(yhat2, None))
    ref2 = _var_loss_ref(yhat2)
    assert jnp.allclose(loss2, ref2, rtol=1e-4, atol=1e-6), (loss2, ref2)

    print("KERNEL_OK")
</pallas_src>

<mosaic_0001>
module attributes {stable_mosaic.version = 11 : i64} {
  func.func @_var_stats_kernel(%arg0: i32, %arg1: i32, %arg2: memref<1xf32, #tpu.memory_space<smem>>, %arg3: memref<16x128xf32, #tpu.memory_space<vmem>>, %arg4: memref<1x1x1xf32, #tpu.memory_space<vmem>>, %arg5: memref<1x1x1xf32, #tpu.memory_space<vmem>>, %arg6: memref<8x128xf32, #tpu.memory_space<vmem>>, %arg7: memref<8x128xf32, #tpu.memory_space<vmem>>) attributes {dimension_semantics = [#tpu.dimension_semantics<parallel>, #tpu.dimension_semantics<arbitrary>], iteration_bounds = array<i64: 1, 1>, scalar_prefetch = 0 : i64, scratch_operands = 2 : i64, tpu.core_type = #tpu.core_type<tc>, window_params = [{transform_indices = @transform_0, window_bounds = array<i64: 1>}, {transform_indices = @transform_1, window_bounds = array<i64: 16, 128>}, {transform_indices = @transform_2, window_bounds = array<i64: 1, 1, 1>}, {transform_indices = @transform_3, window_bounds = array<i64: 1, 1, 1>}]} {
    %c0 = arith.constant 0 : index
    %0 = memref.load %arg2[%c0] : memref<1xf32, #tpu.memory_space<smem>>
    %c0_i32 = arith.constant 0 : i32
    %1 = arith.cmpi eq, %arg1, %c0_i32 : i32
    %2 = arith.extui %1 : i1 to i32
    %c0_i32_0 = arith.constant 0 : i32
    %3 = arith.cmpi ne, %2, %c0_i32_0 : i32
    scf.if %3 {
      %cst_14 = arith.constant 0.000000e+00 : f32
      %23 = vector.broadcast %cst_14 : f32 to vector<8x128xf32>
      %c0_15 = arith.constant 0 : index
      %c0_16 = arith.constant 0 : index
      %24 = vector.load %arg6[%c0_15, %c0_16] : memref<8x128xf32, #tpu.memory_space<vmem>>, vector<8x128xf32>
      tpu.vector_store %arg6[%c0_15, %c0_16], %23 {strides = array<i32>} : memref<8x128xf32, #tpu.memory_space<vmem>>, vector<8x128xf32>,
      %cst_17 = arith.constant 0.000000e+00 : f32
      %25 = vector.broadcast %cst_17 : f32 to vector<8x128xf32>
      %c0_18 = arith.constant 0 : index
      %c0_19 = arith.constant 0 : index
      %26 = vector.load %arg7[%c0_18, %c0_19] : memref<8x128xf32, #tpu.memory_space<vmem>>, vector<8x128xf32>
      tpu.vector_store %arg7[%c0_18, %c0_19], %25 {strides = array<i32>} : memref<8x128xf32, #tpu.memory_space<vmem>>, vector<8x128xf32>,
    } else {
    }
    %c0_i32_1 = arith.constant 0 : i32
    %c16_i32 = arith.constant 16 : i32
    %4 = arith.muli %c0_i32_1, %c16_i32 : i32
    %5 = tpu.assume_multiple %4, 16 : i32
    %6 = arith.index_cast %5 : i32 to index
    %c0_2 = arith.constant 0 : index
    %7 = vector.load %arg3[%6, %c0_2] : memref<16x128xf32, #tpu.memory_space<vmem>>, vector<16x128xf32>
    %8 = vector.broadcast %0 : f32 to vector<16x128xf32>
    %9 = arith.subf %7, %8 : vector<16x128xf32>
    %10 = vector.shape_cast %9 : vector<16x128xf32> to vector<2x8x128xf32>
    %c0_3 = arith.constant 0 : index
    %c0_4 = arith.constant 0 : index
    %11 = vector.load %arg6[%c0_3, %c0_4] : memref<8x128xf32, #tpu.memory_space<vmem>>, vector<8x128xf32>
    %cst = arith.constant dense<0.000000e+00> : vector<8x128xf32>
    %12 = vector.multi_reduction <add>, %10, %cst [0] : vector<2x8x128xf32> to vector<8x128xf32>
    %13 = arith.addf %11, %12 : vector<8x128xf32>
    %c0_5 = arith.constant 0 : index
    %c0_6 = arith.constant 0 : index
    %14 = vector.load %arg6[%c0_5, %c0_6] : memref<8x128xf32, #tpu.memory_space<vmem>>, vector<8x128xf32>
    tpu.vector_store %arg6[%c0_5, %c0_6], %13 {strides = array<i32>} : memref<8x128xf32, #tpu.memory_space<vmem>>, vector<8x128xf32>,
    %c0_7 = arith.constant 0 : index
    %c0_8 = arith.constant 0 : index
    %15 = vector.load %arg7[%c0_7, %c0_8] : memref<8x128xf32, #tpu.memory_space<vmem>>, vector<8x128xf32>
    %16 = arith.mulf %10, %10 : vector<2x8x128xf32>
    %cst_9 = arith.constant dense<0.000000e+00> : vector<8x128xf32>
    %17 = vector.multi_reduction <add>, %16, %cst_9 [0] : vector<2x8x128xf32> to vector<8x128xf32>
    %18 = arith.addf %15, %17 : vector<8x128xf32>
    %c0_10 = arith.constant 0 : index
    %c0_11 = arith.constant 0 : index
    %19 = vector.load %arg7[%c0_10, %c0_11] : memref<8x128xf32, #tpu.memory_space<vmem>>, vector<8x128xf32>
    tpu.vector_store %arg7[%c0_10, %c0_11], %18 {strides = array<i32>} : memref<8x128xf32, #tpu.memory_space<vmem>>, vector<8x128xf32>,
    %c1_i32 = arith.constant 1 : i32
    %c0_i32_12 = arith.constant 0 : i32
    %20 = arith.cmpi eq, %arg1, %c0_i32_12 : i32
    %21 = arith.extui %20 : i1 to i32
    %c0_i32_13 = arith.constant 0 : i32
    %22 = arith.cmpi ne, %21, %c0_i32_13 : i32
    scf.if %22 {
      %c0_14 = arith.constant 0 : index
      %c0_15 = arith.constant 0 : index
      %23 = vector.load %arg6[%c0_14, %c0_15] : memref<8x128xf32, #tpu.memory_space<vmem>>, vector<8x128xf32>
      %24 = vector.shape_cast %23 : vector<8x128xf32> to vector<1x8x128xf32>
      %cst_16 = arith.constant dense<0.000000e+00> : vector<1xf32>
      %25 = vector.multi_reduction <add>, %24, %cst_16 [1, 2] : vector<1x8x128xf32> to vector<1xf32>
      %26 = vector.shape_cast %25 : vector<1xf32> to vector<1x1x1xf32>
      %27 = vector.extract %26[0, 0, 0] : f32 from vector<1x1x1xf32>
      %28 = vector.broadcast %27 : f32 to vector<1x1x1xf32>
      %c0_17 = arith.constant 0 : index
      %c0_18 = arith.constant 0 : index
      %c0_19 = arith.constant 0 : index
      %29 = vector.load %arg4[%c0_17, %c0_18, %c0_19] : memref<1x1x1xf32, #tpu.memory_space<vmem>>, vector<1x1x1xf32>
      tpu.vector_store %arg4[%c0_17, %c0_18, %c0_19], %28 {strides = array<i32>} : memref<1x1x1xf32, #tpu.memory_space<vmem>>, vector<1x1x1xf32>,
      %c0_20 = arith.constant 0 : index
      %c0_21 = arith.constant 0 : index
      %30 = vector.load %arg7[%c0_20, %c0_21] : memref<8x128xf32, #tpu.memory_space<vmem>>, vector<8x128xf32>
      %31 = vector.shape_cast %30 : vector<8x128xf32> to vector<1x8x128xf32>
      %cst_22 = arith.constant dense<0.000000e+00> : vector<1xf32>
      %32 = vector.multi_reduction <add>, %31, %cst_22 [1, 2] : vector<1x8x128xf32> to vector<1xf32>
      %33 = vector.shape_cast %32 : vector<1xf32> to vector<1x1x1xf32>
      %34 = vector.extract %33[0, 0, 0] : f32 from vector<1x1x1xf32>
      %35 = vector.broadcast %34 : f32 to vector<1x1x1xf32>
      %c0_23 = arith.constant 0 : index
      %c0_24 = arith.constant 0 : index
      %c0_25 = arith.constant 0 : index
      %36 = vector.load %arg5[%c0_23, %c0_24, %c0_25] : memref<1x1x1xf32, #tpu.memory_space<vmem>>, vector<1x1x1xf32>
      tpu.vector_store %arg5[%c0_23, %c0_24, %c0_25], %35 {strides = array<i32>} : memref<1x1x1xf32, #tpu.memory_space<vmem>>, vector<1x1x1xf32>,
    } else {
    }
    return
  }
  func.func @transform_0(%arg0: i32, %arg1: i32) -> i32 {
    %c0_i32 = arith.constant 0 : i32
    %c0_i32_0 = arith.constant 0 : i32
    return %c0_i32 : i32
  }
  func.func @transform_1(%arg0: i32, %arg1: i32) -> (i32, i32) {
    %c1_i32 = arith.constant 1 : i32
    %0 = arith.muli %arg0, %c1_i32 : i32
    %1 = arith.addi %0, %arg1 : i32
    %c0_i32 = arith.constant 0 : i32
    %2 = arith.minsi %1, %c0_i32 : i32
    %c0_i32_0 = arith.constant 0 : i32
    %c0_i32_1 = arith.constant 0 : i32
    return %2, %c0_i32_0 : i32, i32
  }
  func.func @transform_2(%arg0: i32, %arg1: i32) -> (i32, i32, i32) {
    %c0_i32 = arith.constant 0 : i32
    %c0_i32_0 = arith.constant 0 : i32
    %c0_i32_1 = arith.constant 0 : i32
    return %arg0, %c0_i32, %c0_i32_0 : i32, i32, i32
  }
  func.func @transform_3(%arg0: i32, %arg1: i32) -> (i32, i32, i32) {
    %c0_i32 = arith.constant 0 : i32
    %c0_i32_0 = arith.constant 0 : i32
    %c0_i32_1 = arith.constant 0 : i32
    return %arg0, %c0_i32, %c0_i32_0 : i32, i32, i32
  }
}

</mosaic_0001>

<llo_original>
// kernel: tpu_custom_call.1
$region0: #{tpu_custom_call.1}
  #allocation0 [shape = 'u32[]', space=smem, size = 0x4, offset = 0x4, fixed_abs, tag = 'smem constant byte address 0x4 - core index']
  #allocation1 [shape = 'u32[144,128]{1,0:T(1,128)}', space=vmem, size = 0x12000, scoped, tag = 'internal scratch']
  #allocation2 [shape = 'f32[8,128]{1,0:T(8,128)}', space=vmem, size = 0x1000, scoped, tag = 'scratch operand']
  #allocation3 [shape = 'f32[8,128]{1,0:T(8,128)}', space=vmem, size = 0x1000, scoped, tag = 'scratch operand']
  #allocation4 [shape = 'f32[1]{0:T(128)S(6)}', space=smem, size = 0x200, scoped, tag = 'scoped memory for tpu_custom_call.1']
  %s0 = inlined_call_operand.<no memory space> [shape: f32[1], index: 0, kind: input, shape index: {}]
  %s1 = inlined_call_operand.hbm [shape: f32[16,128], index: 1, kind: input, shape index: {}]
  %s2 = inlined_call_operand.hbm [shape: f32[1,1,1], index: 2, kind: output, shape index: {0}]
  %s3 = inlined_call_operand.hbm [shape: f32[1,1,1], index: 3, kind: output, shape index: {1}]
  %4 = xla_tuple %s2, %s3
  %s5 = sld [smem:[#allocation0]]
  $region38: #{tpu_custom_call.1} parent=0
    _
  %s7 = ssub.s32 1, %s5
  %s8 = scalar_select 0, %s7, %s5
  %9 = sst [smem:[#allocation4]] %s0
  $region1: #{tpu_custom_call.1} parent=0
    #allocation5 [shape = 'u8[8192]{0}', space=vmem, size = 0x2000, scoped, tag = 'input window, operand 1, single buffered']
    #allocation6 [shape = 's32[1]{0}', space=sflag, size = 0x4, scoped, tag = 'scoped memory for tpu_custom_call.1']
    #allocation7 [shape = 's32[1]{0}', space=sflag, size = 0x4, scoped, tag = 'scoped memory for tpu_custom_call.1']
    #allocation8 [shape = 'u8[512]{0}', space=vmem, size = 0x400, scoped, tag = 'output window, operand 0, single buffered']
    #allocation9 [shape = 'u8[512]{0}', space=vmem, size = 0x400, scoped, tag = 'output window, operand 1, single buffered']
    #allocation10 [shape = 's32[1]{0}', space=sflag, size = 0x4, scoped, tag = 'scoped memory for tpu_custom_call.1']
    %10 = vsyncpa [#allocation6], 0
    %11 = vsyncpa [#allocation7], 0
    %12 = vsyncpa [#allocation10], 0
    // Predicated region
    $region2: #{tpu_custom_call.1} parent=1 // pred_check
      _
    $region3: #{tpu_custom_call.1} parent=1 // pred_check_branch
      %14 = sbr.rel (0) target = $region5
    $region4: #{tpu_custom_call.1} parent=1 // pred_region
      _
    $region5: #{tpu_custom_call.1} parent=1 // pred_fallthru
      _
    // Predicated region
    $region6: #{tpu_custom_call.1} parent=1 // pred_check
      _
    $region7: #{tpu_custom_call.1} parent=1 // pred_check_branch
      %16 = sbr.rel (0) target = $region9
    $region8: #{tpu_custom_call.1} parent=1 // pred_region
      %s17 = sadd.s32 0, 0
      %p18 = scmp.lt.s32.totalorder %s17, 0
      %s19 = scalar_select %p18, %s17, 0
      %s20 = smul.u32 2, %s19
      %s22 = ssub.s32 256, 256
      %23 = vsyncadd [#allocation6], %s22
      %s24 = smul.addr %s20, 128
      %s25 = scalar_lea.hbm %s1, %s24
      %s26 = sshll.u32 [#allocation5], 4
      %s27 = int_to_ptr.vmem [resolvable:$true] %s26
      %32 = dma.hbm_to_vmem [thread:$0]  %s25, 256, %s27, [#allocation6], 128, 128, 8
    $region9: #{tpu_custom_call.1} parent=1 // pred_fallthru
      _
    // Predicated region
    $region10: #{tpu_custom_call.1} parent=1 // pred_check
      _
    $region11: #{tpu_custom_call.1} parent=1 // pred_check_branch
      %34 = sbr.rel (0) target = $region13
    $region12: #{tpu_custom_call.1} parent=1 // pred_region
      %35 = dma.done [#allocation6], 256
    $region13: #{tpu_custom_call.1} parent=1 // pred_fallthru
      _
    %s36 = sadd.s32 0, 0
    %p37 = scmp.lt.s32.totalorder %s36, 0
    %s38 = scalar_select %p37, %s36, 0
    %s39 = smul.u32 2, %s38
    %s40 = sld [smem:[#allocation4]]
    %p41 = scmp.eq.s32.totalorder 0, 0
    // Predicated region
    $region14: #{tpu_custom_call.1} parent=1 // pred_check
      %p42 = pneg %p41
    $region15: #{tpu_custom_call.1} parent=1 // pred_check_branch
      %44 = sbr.rel (%p42) target = $region17
    $region16: #{tpu_custom_call.1} parent=1 // pred_region
      %45 = vst [vmem:[#allocation2] sm:$0xff] 0.0
      %46 = vst [vmem:[#allocation3] sm:$0xff] 0.0
    $region17: #{tpu_custom_call.1} parent=1 // pred_fallthru
      _
    %v47 = vld [vmem:[#allocation5] sm:$0xff]
    %v48 = vld [vmem:[#allocation5 + $0x8] sm:$0xff]
    %v49 = vstv %s40
    %v50 = vsub.f32 %v47, %v49
    %v51 = vsub.f32 %v48, %v49
    %v52 = vld [vmem:[#allocation2] sm:$0xff]
    %v53 = vadd.f32 %v50, %v51
    %v54 = vadd.f32 %v52, %v53
    %55 = vst [vmem:[#allocation2] sm:$0xff] %v54
    %v56 = vld [vmem:[#allocation3] sm:$0xff]
    %v57 = vmul.f32 %v50, %v50
    %v58 = vmul.f32 %v51, %v51
    %v59 = vadd.f32 %v57, %v58
    %v60 = vadd.f32 %v56, %v59
    %61 = vst [vmem:[#allocation3] sm:$0xff] %v60
    // Predicated region
    $region18: #{tpu_custom_call.1} parent=1 // pred_check
      %p62 = pneg %p41
    $region19: #{tpu_custom_call.1} parent=1 // pred_check_branch
      %64 = sbr.rel (%p62) target = $region21
    $region20: #{tpu_custom_call.1} parent=1 // pred_region
      %v65 = vld [vmem:[#allocation2] sm:$0xff]
      %66 = vadd.xlane.f32.xlu0 %v65
      %v67 = vpop.xlane.xlu0 %66
      %v68 = vrot.slane %v67, 4
      %v69 = vadd.f32 %v67, %v68
      %v70 = vrot.slane %v69, 2
      %v71 = vadd.f32 %v69, %v70
      %v72 = vrot.slane %v71, 1
      %v73 = vadd.f32 %v71, %v72
      %s74 = vtos %v73
      %v75 = vstv %s74
      %vm76 = vcmask 0
      %77 = vst.msk [vmem:[#allocation8] sm:$0x1] %vm76, %v75
      %v78 = vld [vmem:[#allocation3] sm:$0xff]
      %79 = vadd.xlane.f32.xlu0 %v78
      %v80 = vpop.xlane.xlu0 %79
      %v81 = vrot.slane %v80, 4
      %v82 = vadd.f32 %v80, %v81
      %v83 = vrot.slane %v82, 2
      %v84 = vadd.f32 %v82, %v83
      %v85 = vrot.slane %v84, 1
      %v86 = vadd.f32 %v84, %v85
      %s87 = vtos %v86
      %v88 = vstv %s87
      %89 = vst.msk [vmem:[#allocation9] sm:$0x1] %vm76, %v88
    $region21: #{tpu_custom_call.1} parent=1 // pred_fallthru
      _
    // Predicated region
    $region22: #{tpu_custom_call.1} parent=1 // pred_check
      _
    $region23: #{tpu_custom_call.1} parent=1 // pred_check_branch
      %91 = sbr.rel (0) target = $region25
    $region24: #{tpu_custom_call.1} parent=1 // pred_region
      %s93 = ssub.s32 16, 16
      %94 = vsyncadd [#allocation7], %s93
      %s96 = sshll.u32 [#allocation8], 4
      %s97 = int_to_ptr.vmem [resolvable:$true] %s96
      %99 = dma.vmem_to_hbm [thread:$0]  %s97, 16, %s2, [#allocation7]
    $region25: #{tpu_custom_call.1} parent=1 // pred_fallthru
      _
    // Predicated region
    $region26: #{tpu_custom_call.1} parent=1 // pred_check
      _
    $region27: #{tpu_custom_call.1} parent=1 // pred_check_branch
      %101 = sbr.rel (0) target = $region29
    $region28: #{tpu_custom_call.1} parent=1 // pred_region
      %s103 = ssub.s32 16, 16
      %104 = vsyncadd [#allocation10], %s103
      %s106 = sshll.u32 [#allocation9], 4
      %s107 = int_to_ptr.vmem [resolvable:$true] %s106
      %109 = dma.vmem_to_hbm [thread:$0]  %s107, 16, %s3, [#allocation10]
    $region29: #{tpu_custom_call.1} parent=1 // pred_fallthru
      _
    // Predicated region
    $region30: #{tpu_custom_call.1} parent=1 // pred_check
      _
    $region31: #{tpu_custom_call.1} parent=1 // pred_check_branch
      %111 = sbr.rel (0) target = $region33
    $region32: #{tpu_custom_call.1} parent=1 // pred_region
      %112 = dma.done [#allocation7], 16
    $region33: #{tpu_custom_call.1} parent=1 // pred_fallthru
      _
    // Predicated region
    $region34: #{tpu_custom_call.1} parent=1 // pred_check
      _
    $region35: #{tpu_custom_call.1} parent=1 // pred_check_branch
      %114 = sbr.rel (0) target = $region37
    $region36: #{tpu_custom_call.1} parent=1 // pred_region
      %115 = dma.done [#allocation10], 16
    $region37: #{tpu_custom_call.1} parent=1 // pred_fallthru
      _
    %116 = vsyncpa [#allocation6], 1
    %117 = vsyncpa [#allocation7], 1
    %118 = vsyncpa [#allocation10], 1

</llo_original>
